<compile_context>
chip_gen: v6e
topology: v6e:2x2x1
jax: 0.10.0
libtpu: 0.0.40
codegen_flags: <defaults>
</compile_context>

<pallas_src>
import functools

import jax
import jax.numpy as jnp
from jax.experimental import pallas as pl
from jax.experimental.pallas import tpu as pltpu


_LANE_CANDIDATES = (8192, 4096, 2048, 1024, 512, 256, 128)
_TARGET_BLOCK_BYTES = 4 * 1024 * 1024   # ~4 MiB per operand per grid step
_VMEM_LIMIT_BYTES = 32 * 1024 * 1024    # 3 operands x 2 bufs x 4 MiB = 24 MiB
_SMALL_FAST_PATH_BYTES = 256 * 1024     # below this a fused XLA add wins


def _advernoise_kernel(x_ref, p_ref, o_ref):
    # Elementwise add; any dtype cast is a free VPU op inside the kernel.
    o_ref[...] = x_ref[...].astype(o_ref.dtype) + p_ref[...].astype(o_ref.dtype)


@functools.partial(jax.jit, static_argnames=("force_pallas",))
def _advernoise_add(x, params, *, force_pallas=False):
    orig_shape = x.shape
    out_dtype = jnp.result_type(x.dtype, params.dtype)
    total = x.size
    out_itemsize = jnp.dtype(out_dtype).itemsize
    min_itemsize = min(jnp.dtype(x.dtype).itemsize,
                       jnp.dtype(params.dtype).itemsize,
                       out_itemsize)

    # Small-tensor fast path: pallas_call fixed overhead dominates and XLA can
    # fuse this add straight into its consumer.
    if (not force_pallas) and total * out_itemsize < _SMALL_FAST_PATH_BYTES:
        return (x.astype(out_dtype) + params.astype(out_dtype)).reshape(orig_shape)

    # Lane-dense view: largest multiple of 128 dividing the element count.
    lane = None
    for cand in _LANE_CANDIDATES:
        if total % cand == 0:
            lane = cand
            break

    if lane is None:
        # Ragged element count: padding/slicing both operands around the kernel
        # would add a full extra HBM pass; the fused XLA elementwise add is
        # itself HBM-roofline bound, so use it directly.
        return (x.astype(out_dtype) + params.astype(out_dtype)).reshape(orig_shape)

    rows = total // lane
    x2 = jnp.ravel(x).reshape(rows, lane)        # bitcast of the NCHW buffer
    p2 = jnp.ravel(params).reshape(rows, lane)

    # Sublane granule: packed dtypes (bf16/int8) put 2/4 rows per sublane, so
    # keep the block's row count a multiple of 16/32 to avoid masked packed
    # loads on the ragged edge.
    granule = 8 if min_itemsize >= 4 else (16 if min_itemsize == 2 else 32)

    # ~4 MiB per operand per step, rounded down to the sublane granule.
    target_rows = max(
        granule,
        (_TARGET_BLOCK_BYTES // (lane * out_itemsize)) // granule * granule)
    if rows <= target_rows:
        tile_r = rows            # block == full array dim: always a legal shape
    else:
        tile_r = target_rows     # granule multiple; ragged last block is masked

    grid = (pl.cdiv(rows, tile_r),)

    out2 = pl.pallas_call(
        _advernoise_kernel,
        out_shape=jax.ShapeDtypeStruct((rows, lane), out_dtype),
        grid_spec=pltpu.PrefetchScalarGridSpec(
            num_scalar_prefetch=0,
            grid=grid,
            in_specs=[
                pl.BlockSpec((tile_r, lane), lambda i: (i, 0)),
                pl.BlockSpec((tile_r, lane), lambda i: (i, 0)),
            ],
            out_specs=pl.BlockSpec((tile_r, lane), lambda i: (i, 0)),
        ),
        compiler_params=pltpu.CompilerParams(
            dimension_semantics=("parallel",),
            vmem_limit_bytes=_VMEM_LIMIT_BYTES,
        ),
    )(x2, p2)

    return out2.reshape(orig_shape)


def advernoise_forward(x, params, *, training=True, force_pallas=False):
    """AdverNoise forward.

    x:      NCHW array
    params: NCHW array, same shape as x (the nn.Parameter of the module)
    """
    # TODO(synk): ReverseNormGrad's gradient renormalization (backward-only)
    # is not represented here; the forward pass is identity through it.
    if not training:
        return x
    assert x.shape == params.shape, "params must match input_size (incl. batch)"
    return _advernoise_add(x, params, force_pallas=force_pallas)


if __name__ == "__main__":
    key = jax.random.PRNGKey(0)
    kx, kp, kx2, kp2, kr = jax.random.split(key, 5)

    # Small shape from the module spec: input_size = (N, C, H, W).
    input_size = (2, 4, 16, 16)
    x = jax.random.normal(kx, input_size, dtype=jnp.float32)
    params_zero = jnp.zeros(input_size, dtype=jnp.float32)           # module init
    params_pert = 0.01 * jax.random.normal(kp, input_size, dtype=jnp.float32)

    # Force the Pallas path on the tiny shape (exercises the block==full-array
    # clamp), plus the default fast path and eval-mode passthrough.
    out_zero = jax.block_until_ready(
        advernoise_forward(x, params_zero, training=True, force_pallas=True))
    out_pert = jax.block_until_ready(
        advernoise_forward(x, params_pert, training=True, force_pallas=True))
    out_fast = jax.block_until_ready(advernoise_forward(x, params_pert, training=True))
    out_eval = jax.block_until_ready(advernoise_forward(x, params_pert, training=False))

    assert out_zero.shape == input_size and out_zero.dtype == x.dtype
    assert jnp.allclose(out_zero, x, atol=1e-6)
    assert jnp.allclose(out_pert, x + params_pert, atol=1e-6)
    assert jnp.allclose(out_fast, out_pert, atol=1e-6)
    assert jnp.allclose(out_eval, x, atol=0.0)      # eval mode: passthrough

    # A realistic activation size that takes the Pallas path by default.
    big_size = (2, 4, 128, 128)
    xb = jax.random.normal(kx2, big_size, dtype=jnp.float32)
    pb = 0.01 * jax.random.normal(kp2, big_size, dtype=jnp.float32)
    out_big = jax.block_until_ready(advernoise_forward(xb, pb, training=True))
    assert jnp.allclose(out_big, xb + pb, atol=1e-6)

    # Mixed-dtype path: add happens in the promoted dtype inside the kernel.
    out_mix = jax.block_until_ready(
        advernoise_forward(xb.astype(jnp.bfloat16), pb, training=True))
    assert out_mix.dtype == jnp.float32
    assert jnp.allclose(out_mix, xb.astype(jnp.bfloat16).astype(jnp.float32) + pb,
                        atol=1e-6)

    # Ragged element count (not a multiple of 128): fused-XLA fallback.
    xr = jax.random.normal(kr, (2, 3, 5, 7), dtype=jnp.float32)
    pr = 0.01 * jax.random.normal(kp, (2, 3, 5, 7), dtype=jnp.float32)
    out_r = jax.block_until_ready(advernoise_forward(xr, pr, training=True))
    assert jnp.allclose(out_r, xr + pr, atol=1e-6)

    print("KERNEL_OK")
</pallas_src>

<mosaic_0001>
module attributes {stable_mosaic.version = 11 : i64} {
  func.func @_advernoise_kernel(%arg0: i32, %arg1: memref<1x2048xf32, #tpu.memory_space<vmem>>, %arg2: memref<1x2048xf32, #tpu.memory_space<vmem>>, %arg3: memref<1x2048xf32, #tpu.memory_space<vmem>>) attributes {dimension_semantics = [#tpu.dimension_semantics<parallel>], iteration_bounds = array<i64: 1>, scalar_prefetch = 0 : i64, scratch_operands = 0 : i64, tpu.core_type = #tpu.core_type<tc>, window_params = [{transform_indices = @transform_0, window_bounds = array<i64: 1, 2048>}, {transform_indices = @transform_1, window_bounds = array<i64: 1, 2048>}, {transform_indices = @transform_2, window_bounds = array<i64: 1, 2048>}]} {
    %c0 = arith.constant 0 : index
    %c0_0 = arith.constant 0 : index
    %0 = vector.load %arg1[%c0, %c0_0] : memref<1x2048xf32, #tpu.memory_space<vmem>>, vector<1x2048xf32>
    %c0_1 = arith.constant 0 : index
    %c0_2 = arith.constant 0 : index
    %1 = vector.load %arg2[%c0_1, %c0_2] : memref<1x2048xf32, #tpu.memory_space<vmem>>, vector<1x2048xf32>
    %2 = arith.addf %0, %1 : vector<1x2048xf32>
    %c0_3 = arith.constant 0 : index
    %c0_4 = arith.constant 0 : index
    %3 = vector.load %arg3[%c0_3, %c0_4] : memref<1x2048xf32, #tpu.memory_space<vmem>>, vector<1x2048xf32>
    tpu.vector_store %arg3[%c0_3, %c0_4], %2 {strides = array<i32>} : memref<1x2048xf32, #tpu.memory_space<vmem>>, vector<1x2048xf32>,
    return
  }
  func.func @transform_0(%arg0: i32) -> (i32, i32) {
    %c0_i32 = arith.constant 0 : i32
    %c0_i32_0 = arith.constant 0 : i32
    return %arg0, %c0_i32 : i32, i32
  }
  func.func @transform_1(%arg0: i32) -> (i32, i32) {
    %c0_i32 = arith.constant 0 : i32
    %c0_i32_0 = arith.constant 0 : i32
    return %arg0, %c0_i32 : i32, i32
  }
  func.func @transform_2(%arg0: i32) -> (i32, i32) {
    %c0_i32 = arith.constant 0 : i32
    %c0_i32_0 = arith.constant 0 : i32
    return %arg0, %c0_i32 : i32, i32
  }
}

</mosaic_0001>

<llo_original>
// kernel: _advernoise_add.1
$region0: #{_advernoise_add.1}
  #allocation0 [shape = 'u32[]', space=smem, size = 0x4, offset = 0x4, fixed_abs, tag = 'smem constant byte address 0x4 - core index']
  #allocation1 [shape = 'u32[144,128]{1,0:T(1,128)}', space=vmem, size = 0x12000, scoped, tag = 'internal scratch']
  %s0 = inlined_call_operand.vmem [shape: f32[1,2048], index: 0, kind: input, shape index: {}]
  %s1 = inlined_call_operand.vmem [shape: f32[1,2048], index: 1, kind: input, shape index: {}]
  %s2 = inlined_call_operand.vmem [shape: f32[1,2048], index: 2, kind: output, shape index: {}]
  %s3 = sld [smem:[#allocation0]]
  $region18: #{_advernoise_add.1} parent=0
    _
  %s5 = ssub.s32 1, %s3
  %s6 = scalar_select 0, %s5, %s3
  // Predicated region
  $region2: #{_advernoise_add.1} parent=0 // pred_check
    _
  $region3: #{_advernoise_add.1} parent=0 // pred_check_branch
    %8 = sbr.rel (0) target = $region5
  $region4: #{_advernoise_add.1} parent=0 // pred_region
    _
  $region5: #{_advernoise_add.1} parent=0 // pred_fallthru
    _
  // Predicated region
  $region6: #{_advernoise_add.1} parent=0 // pred_check
    _
  $region7: #{_advernoise_add.1} parent=0 // pred_check_branch
    %10 = sbr.rel (0) target = $region9
  $region8: #{_advernoise_add.1} parent=0 // pred_region
    _
  $region9: #{_advernoise_add.1} parent=0 // pred_fallthru
    _
  %v11 = vld [vmem:[%s0] sm:$0xff]
  %v12 = vld [vmem:[%s0 + $0x8] sm:$0xff]
  %v13 = vld [vmem:[%s1] sm:$0xff]
  %v14 = vld [vmem:[%s1 + $0x8] sm:$0xff]
  %v15 = vadd.f32 %v11, %v13
  %v16 = vadd.f32 %v12, %v14
  %17 = vst [vmem:[%s2] sm:$0xff] %v15
  %18 = vst [vmem:[%s2 + $0x8] sm:$0xff] %v16
  // Predicated region
  $region10: #{_advernoise_add.1} parent=0 // pred_check
    _
  $region11: #{_advernoise_add.1} parent=0 // pred_check_branch
    %20 = sbr.rel (0) target = $region13
  $region12: #{_advernoise_add.1} parent=0 // pred_region
    _
  $region13: #{_advernoise_add.1} parent=0 // pred_fallthru
    _
  // Predicated region
  $region14: #{_advernoise_add.1} parent=0 // pred_check
    _
  $region15: #{_advernoise_add.1} parent=0 // pred_check_branch
    %22 = sbr.rel (0) target = $region17
  $region16: #{_advernoise_add.1} parent=0 // pred_region
    _
  $region17: #{_advernoise_add.1} parent=0 // pred_fallthru
    _

</llo_original>
